<compile_context>
chip_gen: v5e
topology: v5e:2x2
jax: 0.10.0
libtpu: 0.0.40
codegen_flags: <defaults>
</compile_context>

<pallas_src>
import functools

import jax
import jax.numpy as jnp
from jax import lax
from jax.experimental import pallas as pl
from jax.experimental.pallas import tpu as pltpu


def _relu_conv_bn_kernel(x_ref, w_ref, gamma_ref, beta_ref, rmap_ref, emap_ref,
                         o_ref, *, K, stride, Ho, Wo, C_out, N, eps):
    # x_ref    : (N, Hp, Wp*C_in)        bf16, zero-padded, channels folded in W
    # w_ref    : (K*Wp*C_in, Wo*C_out)   bf16, tap-stacked banded block-Toeplitz
    # gamma_ref: (1, C_out)              f32 BN scale
    # beta_ref : (1, C_out)              f32 BN shift
    # rmap_ref : (Wo*C_out, C_out)       f32 0/1 lane-group -> channel reduce map
    # emap_ref : (C_out, Wo*C_out)       f32 0/1 channel -> lane-group expand map
    # o_ref    : (N*Ho, Wo*C_out)        lane-dense output (model dtype)
    WpC = x_ref.shape[2]
    WoC = Wo * C_out
    count = float(N * Ho * Wo)

    # ---- Build the fused lhs: (N*Ho, K*Wp*C_in), ReLU applied --------------
    rows_per_img = []
    for n in range(N):                                   # N is tiny and static
        xr = jnp.maximum(x_ref[n], 0)                    # bf16 (Hp, Wp*C_in)
        taps = []
        for kh in range(K):
            if stride == 1:
                taps.append(xr[kh:kh + Ho, :])           # plain static slice
            else:
                # TODO(synk): pre-split stride phases host-side for stride > 1.
                taps.append(lax.slice(xr, (kh, 0),
                                      (kh + (Ho - 1) * stride + 1, WpC),
                                      (stride, 1)))
        rows_per_img.append(jnp.concatenate(taps, axis=1))      # (Ho, K*Wp*C_in)
    lhs = jnp.concatenate(rows_per_img, axis=0)                 # (N*Ho, K*Wp*C_in)

    # ---- ReLU + conv: one bf16 MXU matmul, f32 accumulation ----------------
    conv = jnp.dot(lhs, w_ref[...],
                   preferred_element_type=jnp.float32)          # (N*Ho, Wo*C_out)

    # ---- BatchNorm2d batch statistics, one pass ----------------------------
    # Per-channel sums via tiny matmuls against the 0/1 reduction map (avoids
    # any lane<->sublane relayout of the packed layout).
    row_sum = jnp.sum(conv, axis=0, keepdims=True)              # (1, Wo*C_out)
    row_ssq = jnp.sum(conv * conv, axis=0, keepdims=True)       # (1, Wo*C_out)
    ch_sum = jnp.dot(row_sum, rmap_ref[...],
                     preferred_element_type=jnp.float32)        # (1, C_out)
    ch_ssq = jnp.dot(row_ssq, rmap_ref[...],
                     preferred_element_type=jnp.float32)        # (1, C_out)
    mean_c = ch_sum / count
    var_c = jnp.maximum(ch_ssq / count - mean_c * mean_c, 0.0)  # biased var

    scale_c = gamma_ref[...] * lax.rsqrt(var_c + eps)
    shift_c = beta_ref[...] - mean_c * scale_c
    scale_l = jnp.dot(scale_c, emap_ref[...],
                      preferred_element_type=jnp.float32)       # (1, Wo*C_out)
    shift_l = jnp.dot(shift_c, emap_ref[...],
                      preferred_element_type=jnp.float32)

    o_ref[...] = (conv * scale_l + shift_l).astype(o_ref.dtype)


def pack_params(weight, gamma, beta, *, H, W, kernel_size, stride, padding,
                mxu_dtype=jnp.bfloat16):
    """One-time (per weight) packing: tap-stacked banded block-Toeplitz conv
    weight plus BN affine params and channel<->lane reduction/expansion maps.
    Call this OUTSIDE the per-step path."""
    C_out, C_in, K, _ = weight.shape
    assert K == kernel_size
    Hp, Wp = H + 2 * padding, W + 2 * padding
    Wo = (W + 2 * padding - K) // stride + 1

    # w_stacked[kh*Wp*C_in + w*C_in + c, j*C_out + co] =
    #   weight[co, c, kh, kw]  if w == j*stride + kw  else 0.
    # TODO(synk): for C_in >= 128 drop this Wo-replicated layout (structural
    # zeros waste ~Wp/K of HBM/VMEM/MXU) and contract over C_in directly.
    w_taps = jnp.transpose(weight, (2, 3, 1, 0)).astype(jnp.float32)  # (K,K,Ci,Co)
    wk = jnp.zeros((K, Wp, C_in, Wo, C_out), jnp.float32)
    j = jnp.arange(Wo)
    for kh in range(K):
        for kw in range(K):
            wk = wk.at[kh, j * stride + kw, :, j, :].set(w_taps[kh, kw])
    w_stacked = wk.reshape(K * Wp * C_in, Wo * C_out).astype(mxu_dtype)

    rmap = jnp.tile(jnp.eye(C_out, dtype=jnp.float32), (Wo, 1))  # (Wo*C_out, C_out)
    emap = rmap.T                                                # (C_out, Wo*C_out)
    gamma2 = gamma.reshape(1, C_out).astype(jnp.float32)
    beta2 = beta.reshape(1, C_out).astype(jnp.float32)
    return dict(w=w_stacked, rmap=rmap, emap=emap, gamma=gamma2, beta=beta2)


def relu_conv_bn(x_nchw, params, *, kernel_size, stride, padding, eps=1e-5,
                 mxu_dtype=jnp.bfloat16):
    """ReLUConvBN forward. x_nchw: (N, C_in, H, W) -> (N, C_out, Ho, Wo)."""
    N, C_in, H, W = x_nchw.shape
    K = kernel_size
    C_out = params["gamma"].shape[1]
    Ho = (H + 2 * padding - K) // stride + 1
    Wo = (W + 2 * padding - K) // stride + 1
    Hp, Wp = H + 2 * padding, W + 2 * padding

    # Glue: NCHW -> NHWC, zero-pad, fold C into W (lane packing), bf16 for MXU.
    # (ReLU is applied inside the kernel; relu(0-pad) == 0-pad(relu), and
    #  bf16-cast then ReLU == ReLU then bf16-cast.)
    x_nhwc = jnp.transpose(x_nchw, (0, 2, 3, 1))
    x_pad = jnp.pad(x_nhwc,
                    ((0, 0), (padding, padding), (padding, padding), (0, 0)))
    x_packed = x_pad.reshape(N, Hp, Wp * C_in).astype(mxu_dtype)

    kernel = functools.partial(
        _relu_conv_bn_kernel, K=K, stride=stride, Ho=Ho, Wo=Wo,
        C_out=C_out, N=N, eps=eps)

    vmem_spec = pl.BlockSpec(memory_space=pltpu.MemorySpace.VMEM)
    out_flat = pl.pallas_call(
        kernel,
        out_shape=jax.ShapeDtypeStruct((N * Ho, Wo * C_out), x_nchw.dtype),
        in_specs=[vmem_spec] * 6,
        out_specs=vmem_spec,
    )(x_packed, params["w"], params["gamma"], params["beta"],
      params["rmap"], params["emap"])

    out_nhwc = out_flat.reshape(N, Ho, Wo, C_out)
    return jnp.transpose(out_nhwc, (0, 3, 1, 2))


def _reference(x, weight, gamma, beta, *, stride, padding, eps=1e-5):
    """Pure-JAX f32 reference mimicking PyTorch ReLUConvBN train-mode forward."""
    y = jnp.maximum(x, 0.0)
    y = lax.conv_general_dilated(
        y, weight,
        window_strides=(stride, stride),
        padding=((padding, padding), (padding, padding)),
        dimension_numbers=("NCHW", "OIHW", "NCHW"))
    mean = jnp.mean(y, axis=(0, 2, 3))
    var = jnp.var(y, axis=(0, 2, 3))            # biased, as PyTorch normalizes
    y = (y - mean[None, :, None, None]) * lax.rsqrt(var[None, :, None, None] + eps)
    return gamma[None, :, None, None] * y + beta[None, :, None, None]


if __name__ == "__main__":
    # ReLUConvBN(C_in=4, C_out=8, kernel_size=3, stride=1, padding=1)
    N, C_in, C_out = 2, 4, 8
    H = W = 16
    kernel_size, stride, padding = 3, 1, 1

    key = jax.random.PRNGKey(0)
    kx, kw, kg, kb = jax.random.split(key, 4)
    x = jax.random.normal(kx, (N, C_in, H, W), dtype=jnp.float32)
    weight = 0.1 * jax.random.normal(
        kw, (C_out, C_in, kernel_size, kernel_size), dtype=jnp.float32)
    gamma = 1.0 + 0.1 * jax.random.normal(kg, (C_out,), dtype=jnp.float32)
    beta = 0.1 * jax.random.normal(kb, (C_out,), dtype=jnp.float32)

    # Weight packing happens once per weight, outside the jitted step.
    params = pack_params(weight, gamma, beta, H=H, W=W,
                         kernel_size=kernel_size, stride=stride,
                         padding=padding)

    run = jax.jit(functools.partial(
        relu_conv_bn, kernel_size=kernel_size, stride=stride, padding=padding))
    out = jax.block_until_ready(run(x, params))

    ref = _reference(x, weight, gamma, beta, stride=stride, padding=padding)

    assert out.shape == ref.shape, (out.shape, ref.shape)
    # Tolerance loosened vs. the f32 reference because the conv operands are
    # fed to the MXU in bf16 (accumulation and BN statistics remain f32).
    assert jnp.allclose(out, ref, atol=5e-2, rtol=5e-2), (
        float(jnp.max(jnp.abs(out - ref))))
    print("KERNEL_OK")
</pallas_src>

<mosaic_0001>
module attributes {stable_mosaic.version = 11 : i64} {
  func.func @_relu_conv_bn_kernel(%arg0: memref<2x18x72xbf16, #tpu.memory_space<vmem>>, %arg1: memref<216x128xbf16, #tpu.memory_space<vmem>>, %arg2: memref<1x8xf32, #tpu.memory_space<vmem>>, %arg3: memref<1x8xf32, #tpu.memory_space<vmem>>, %arg4: memref<128x8xf32, #tpu.memory_space<vmem>>, %arg5: memref<8x128xf32, #tpu.memory_space<vmem>>, %arg6: memref<32x128xf32, #tpu.memory_space<vmem>>) attributes {dimension_semantics = [], scalar_prefetch = 0 : i64, scratch_operands = 0 : i64, tpu.core_type = #tpu.core_type<tc>} {
    %c0 = arith.constant 0 : index
    %c0_0 = arith.constant 0 : index
    %c0_1 = arith.constant 0 : index
    %0 = vector.load %arg0[%c0, %c0_0, %c0_1] : memref<2x18x72xbf16, #tpu.memory_space<vmem>>, vector<1x18x72xbf16>
    %1 = vector.shape_cast %0 : vector<1x18x72xbf16> to vector<18x72xbf16>
    %cst = arith.constant 0.000000e+00 : bf16
    %2 = vector.broadcast %cst : bf16 to vector<18x72xbf16>
    %3 = arith.maximumf %1, %2 : vector<18x72xbf16>
    %4 = vector.extract_strided_slice %3 {offsets = [0, 0], sizes = [16, 72], strides = [1, 1]} : vector<18x72xbf16> to vector<16x72xbf16>
    %5 = vector.extract_strided_slice %3 {offsets = [1, 0], sizes = [16, 72], strides = [1, 1]} : vector<18x72xbf16> to vector<16x72xbf16>
    %6 = vector.extract_strided_slice %3 {offsets = [2, 0], sizes = [16, 72], strides = [1, 1]} : vector<18x72xbf16> to vector<16x72xbf16>
    %7 = tpu.concatenate %4, %5, %6 in 1 : vector<16x72xbf16>, vector<16x72xbf16>, vector<16x72xbf16> -> vector<16x216xbf16>
    %c1 = arith.constant 1 : index
    %c0_2 = arith.constant 0 : index
    %c0_3 = arith.constant 0 : index
    %8 = vector.load %arg0[%c1, %c0_2, %c0_3] : memref<2x18x72xbf16, #tpu.memory_space<vmem>>, vector<1x18x72xbf16>
    %9 = vector.shape_cast %8 : vector<1x18x72xbf16> to vector<18x72xbf16>
    %cst_4 = arith.constant 0.000000e+00 : bf16
    %10 = vector.broadcast %cst_4 : bf16 to vector<18x72xbf16>
    %11 = arith.maximumf %9, %10 : vector<18x72xbf16>
    %12 = vector.extract_strided_slice %11 {offsets = [0, 0], sizes = [16, 72], strides = [1, 1]} : vector<18x72xbf16> to vector<16x72xbf16>
    %13 = vector.extract_strided_slice %11 {offsets = [1, 0], sizes = [16, 72], strides = [1, 1]} : vector<18x72xbf16> to vector<16x72xbf16>
    %14 = vector.extract_strided_slice %11 {offsets = [2, 0], sizes = [16, 72], strides = [1, 1]} : vector<18x72xbf16> to vector<16x72xbf16>
    %15 = tpu.concatenate %12, %13, %14 in 1 : vector<16x72xbf16>, vector<16x72xbf16>, vector<16x72xbf16> -> vector<16x216xbf16>
    %16 = tpu.concatenate %7, %15 in 0 : vector<16x216xbf16>, vector<16x216xbf16> -> vector<32x216xbf16>
    %c0_5 = arith.constant 0 : index
    %c0_6 = arith.constant 0 : index
    %17 = vector.load %arg1[%c0_5, %c0_6] : memref<216x128xbf16, #tpu.memory_space<vmem>>, vector<216x128xbf16>
    %cst_7 = arith.constant dense<0.000000e+00> : vector<32x128xf32>
    %18 = tpu.matmul %16, %17, %cst_7 {dimension_numbers = #tpu.dot_dimension_numbers<[1], [0], [0], [1], [0, 0, 1, 1], [], []>} : vector<32x216xbf16>, vector<216x128xbf16>, vector<32x128xf32> -> vector<32x128xf32>
    %cst_8 = arith.constant dense<0.000000e+00> : vector<128xf32>
    %19 = vector.multi_reduction <add>, %18, %cst_8 [0] : vector<32x128xf32> to vector<128xf32>
    %20 = vector.shape_cast %19 : vector<128xf32> to vector<1x128xf32>
    %21 = arith.mulf %18, %18 : vector<32x128xf32>
    %cst_9 = arith.constant dense<0.000000e+00> : vector<128xf32>
    %22 = vector.multi_reduction <add>, %21, %cst_9 [0] : vector<32x128xf32> to vector<128xf32>
    %23 = vector.shape_cast %22 : vector<128xf32> to vector<1x128xf32>
    %c0_10 = arith.constant 0 : index
    %c0_11 = arith.constant 0 : index
    %24 = vector.load %arg4[%c0_10, %c0_11] : memref<128x8xf32, #tpu.memory_space<vmem>>, vector<128x8xf32>
    %cst_12 = arith.constant dense<0.000000e+00> : vector<1x8xf32>
    %25 = tpu.matmul %20, %24, %cst_12 {dimension_numbers = #tpu.dot_dimension_numbers<[1], [0], [0], [1], [0, 0, 1, 1], [], []>} : vector<1x128xf32>, vector<128x8xf32>, vector<1x8xf32> -> vector<1x8xf32>
    %c0_13 = arith.constant 0 : index
    %c0_14 = arith.constant 0 : index
    %26 = vector.load %arg4[%c0_13, %c0_14] : memref<128x8xf32, #tpu.memory_space<vmem>>, vector<128x8xf32>
    %cst_15 = arith.constant dense<0.000000e+00> : vector<1x8xf32>
    %27 = tpu.matmul %23, %26, %cst_15 {dimension_numbers = #tpu.dot_dimension_numbers<[1], [0], [0], [1], [0, 0, 1, 1], [], []>} : vector<1x128xf32>, vector<128x8xf32>, vector<1x8xf32> -> vector<1x8xf32>
    %cst_16 = arith.constant 5.120000e+02 : f32
    %28 = vector.broadcast %cst_16 : f32 to vector<1x8xf32>
    %29 = arith.divf %25, %28 : vector<1x8xf32>
    %cst_17 = arith.constant 5.120000e+02 : f32
    %30 = vector.broadcast %cst_17 : f32 to vector<1x8xf32>
    %31 = arith.divf %27, %30 : vector<1x8xf32>
    %32 = arith.mulf %29, %29 : vector<1x8xf32>
    %33 = arith.subf %31, %32 : vector<1x8xf32>
    %cst_18 = arith.constant 0.000000e+00 : f32
    %34 = vector.broadcast %cst_18 : f32 to vector<1x8xf32>
    %35 = arith.maximumf %33, %34 : vector<1x8xf32>
    %c0_19 = arith.constant 0 : index
    %c0_20 = arith.constant 0 : index
    %36 = vector.load %arg2[%c0_19, %c0_20] : memref<1x8xf32, #tpu.memory_space<vmem>>, vector<1x8xf32>
    %cst_21 = arith.constant 9.99999974E-6 : f32
    %37 = vector.broadcast %cst_21 : f32 to vector<1x8xf32>
    %38 = arith.addf %35, %37 : vector<1x8xf32>
    %39 = math.rsqrt %38 : vector<1x8xf32>
    %40 = arith.mulf %36, %39 : vector<1x8xf32>
    %c0_22 = arith.constant 0 : index
    %c0_23 = arith.constant 0 : index
    %41 = vector.load %arg3[%c0_22, %c0_23] : memref<1x8xf32, #tpu.memory_space<vmem>>, vector<1x8xf32>
    %42 = arith.mulf %29, %40 : vector<1x8xf32>
    %43 = arith.subf %41, %42 : vector<1x8xf32>
    %c0_24 = arith.constant 0 : index
    %c0_25 = arith.constant 0 : index
    %44 = vector.load %arg5[%c0_24, %c0_25] : memref<8x128xf32, #tpu.memory_space<vmem>>, vector<8x128xf32>
    %cst_26 = arith.constant dense<0.000000e+00> : vector<1x128xf32>
    %45 = tpu.matmul %40, %44, %cst_26 {dimension_numbers = #tpu.dot_dimension_numbers<[1], [0], [0], [1], [0, 0, 1, 1], [], []>} : vector<1x8xf32>, vector<8x128xf32>, vector<1x128xf32> -> vector<1x128xf32>
    %c0_27 = arith.constant 0 : index
    %c0_28 = arith.constant 0 : index
    %46 = vector.load %arg5[%c0_27, %c0_28] : memref<8x128xf32, #tpu.memory_space<vmem>>, vector<8x128xf32>
    %cst_29 = arith.constant dense<0.000000e+00> : vector<1x128xf32>
    %47 = tpu.matmul %43, %46, %cst_29 {dimension_numbers = #tpu.dot_dimension_numbers<[1], [0], [0], [1], [0, 0, 1, 1], [], []>} : vector<1x8xf32>, vector<8x128xf32>, vector<1x128xf32> -> vector<1x128xf32>
    %48 = vector.broadcast %45 : vector<1x128xf32> to vector<32x128xf32>
    %49 = arith.mulf %18, %48 : vector<32x128xf32>
    %50 = vector.broadcast %47 : vector<1x128xf32> to vector<32x128xf32>
    %51 = arith.addf %49, %50 : vector<32x128xf32>
    %c0_30 = arith.constant 0 : index
    %c0_31 = arith.constant 0 : index
    %52 = vector.load %arg6[%c0_30, %c0_31] : memref<32x128xf32, #tpu.memory_space<vmem>>, vector<32x128xf32>
    tpu.vector_store %arg6[%c0_30, %c0_31], %51 {strides = array<i32>} : memref<32x128xf32, #tpu.memory_space<vmem>>, vector<32x128xf32>,
    return
  }
}

</mosaic_0001>

<llo_original>
// kernel: relu_conv_bn.1
$region0: #{relu_conv_bn.1}
  #allocation0 [shape = 'u32[]', space=smem, size = 0x4, offset = 0x4, fixed_abs, tag = 'smem constant byte address 0x4 - core index']
  #allocation1 [shape = 'u32[72,128]{1,0:T(1,128)}', space=vmem, size = 0x9000, scoped, tag = 'internal scratch']
  %s0 = inlined_call_operand.vmem [shape: bf16[2,18,72], index: 0, kind: input, shape index: {}]
  %s1 = inlined_call_operand.vmem [shape: bf16[216,128], index: 1, kind: input, shape index: {}]
  %s2 = inlined_call_operand.vmem [shape: f32[1,8], index: 2, kind: input, shape index: {}]
  %s3 = inlined_call_operand.vmem [shape: f32[1,8], index: 3, kind: input, shape index: {}]
  %s4 = inlined_call_operand.vmem [shape: f32[128,8], index: 4, kind: input, shape index: {}]
  %s5 = inlined_call_operand.vmem [shape: f32[8,128], index: 5, kind: input, shape index: {}]
  %s6 = inlined_call_operand.vmem [shape: f32[32,128], index: 6, kind: output, shape index: {}]
  %s7 = sld [smem:[#allocation0]]
  $region34: #{relu_conv_bn.1} parent=0
    _
  %s9 = ssub.s32 1, %s7
  %s10 = scalar_select 0, %s9, %s7
  // Predicated region
  $region2: #{relu_conv_bn.1} parent=0 // pred_check
    _
  $region3: #{relu_conv_bn.1} parent=0 // pred_check_branch
    %12 = sbr.rel (0) target = $region5
  $region4: #{relu_conv_bn.1} parent=0 // pred_region
    _
  $region5: #{relu_conv_bn.1} parent=0 // pred_fallthru
    _
  // Predicated region
  $region6: #{relu_conv_bn.1} parent=0 // pred_check
    _
  $region7: #{relu_conv_bn.1} parent=0 // pred_check_branch
    %14 = sbr.rel (0) target = $region9
  $region8: #{relu_conv_bn.1} parent=0 // pred_region
    _
  $region9: #{relu_conv_bn.1} parent=0 // pred_fallthru
    _
  // Predicated region
  $region10: #{relu_conv_bn.1} parent=0 // pred_check
    _
  $region11: #{relu_conv_bn.1} parent=0 // pred_check_branch
    %16 = sbr.rel (0) target = $region13
  $region12: #{relu_conv_bn.1} parent=0 // pred_region
    _
  $region13: #{relu_conv_bn.1} parent=0 // pred_fallthru
    _
  // Predicated region
  $region14: #{relu_conv_bn.1} parent=0 // pred_check
    _
  $region15: #{relu_conv_bn.1} parent=0 // pred_check_branch
    %18 = sbr.rel (0) target = $region17
  $region16: #{relu_conv_bn.1} parent=0 // pred_region
    _
  $region17: #{relu_conv_bn.1} parent=0 // pred_fallthru
    _
  // Predicated region
  $region18: #{relu_conv_bn.1} parent=0 // pred_check
    _
  $region19: #{relu_conv_bn.1} parent=0 // pred_check_branch
    %20 = sbr.rel (0) target = $region21
  $region20: #{relu_conv_bn.1} parent=0 // pred_region
    _
  $region21: #{relu_conv_bn.1} parent=0 // pred_fallthru
    _
  // Predicated region
  $region22: #{relu_conv_bn.1} parent=0 // pred_check
    _
  $region23: #{relu_conv_bn.1} parent=0 // pred_check_branch
    %22 = sbr.rel (0) target = $region25
  $region24: #{relu_conv_bn.1} parent=0 // pred_region
    _
  $region25: #{relu_conv_bn.1} parent=0 // pred_fallthru
    _
  %v24 = vld [vmem:[%s0] sm:$0xf]
  %v25 = vld [vmem:[%s0 + $0x4] sm:$0xf]
  %v26 = vld [vmem:[%s0 + $0x8] sm:$0x1]
  %v27 = vunpack.c.l.bf16 %v24
  %v28 = vunpack.c.l.bf16 %v25
  %v29 = vunpack.c.l.bf16 %v26
  %v30 = vmax.f32 %v27, 0.0
  %v31 = vmax.f32 %v28, 0.0
  %v32 = vmax.f32 %v29, 0.0
  %v33 = vpack.c.bf16 %v30, %v30
  %v34 = vpack.c.bf16 %v31, %v31
  %v35 = vpack.c.bf16 %v32, %v32
  %v38 = vunpack.c.l.b16 %v33
  %v39 = vunpack.c.l.b16 %v34
  %v40 = vpack.c.b16 %v39, %v38
  %v42 = vunpack.c.l.b16 %v35
  %v43 = vpack.c.b16 %v42, %v42
  %vm44 = vsmask.f32 7424
  %v46 = vshrl.u32 %v40, 16
  %v48 = vshll.u32 %v40, 16
  %v50 = vrot.slane %v48, 1
  %v51 = vor.u32 %v46, %v50
  %v53 = vshll.u32 %v43, 16
  %v55 = vrot.slane %v53, 1
  %v56 = vsel %vm44, %v51, %v55
  %57 = vrot.lane.b32.xlu0 %v56, 72
  %v58 = vpop.permute.xlu0 %57
  %vm59 = vcmask 1046528
  %v60 = vrot.slane %v40, 1
  %v61 = vrot.slane %v43, 1
  %v62 = vsel %vm59, %v60, %v61
  %63 = vrot.lane.b32.xlu0 %v62, 16
  %v64 = vpop.permute.xlu0 %63
  %vm65 = vcmask 588800
  %v67 = vsel %vm65, %v40, %v58
  %vm69 = vcmask 130048
  %v71 = vsel %vm69, %v58, %v64
  %s72 = scalar_lea.vmem %s0, 12
  %v73 = vld [vmem:[%s72] sm:$0xf]
  %v74 = vld [vmem:[%s72 + $0x4] sm:$0xf]
  %v75 = vld [vmem:[%s72 + $0x8] sm:$0x1]
  %v76 = vunpack.c.l.bf16 %v73
  %v77 = vunpack.c.l.bf16 %v74
  %v78 = vunpack.c.l.bf16 %v75
  %v79 = vmax.f32 %v76, 0.0
  %v80 = vmax.f32 %v77, 0.0
  %v81 = vmax.f32 %v78, 0.0
  %v82 = vpack.c.bf16 %v79, %v79
  %v83 = vpack.c.bf16 %v80, %v80
  %v84 = vpack.c.bf16 %v81, %v81
  %v87 = vunpack.c.l.b16 %v82
  %v88 = vunpack.c.l.b16 %v83
  %v89 = vpack.c.b16 %v88, %v87
  %v91 = vunpack.c.l.b16 %v84
  %v92 = vpack.c.b16 %v91, %v91
  %v94 = vshrl.u32 %v89, 16
  %v96 = vshll.u32 %v89, 16
  %v98 = vrot.slane %v96, 1
  %v99 = vor.u32 %v94, %v98
  %v101 = vshll.u32 %v92, 16
  %v103 = vrot.slane %v101, 1
  %v104 = vsel %vm44, %v99, %v103
  %105 = vrot.lane.b32.xlu0 %v104, 72
  %v106 = vpop.permute.xlu0 %105
  %v107 = vrot.slane %v89, 1
  %v108 = vrot.slane %v92, 1
  %v109 = vsel %vm59, %v107, %v108
  %110 = vrot.lane.b32.xlu0 %v109, 16
  %v111 = vpop.permute.xlu0 %110
  %v113 = vsel %vm65, %v89, %v106
  %v116 = vsel %vm69, %v106, %v111
  %v117 = vld [vmem:[%s1] sm:$0xf]
  %v118 = vld [vmem:[%s1 + $0x4] sm:$0xf]
  %v119 = vld [vmem:[%s1 + $0x8] sm:$0xf]
  %v120 = vld [vmem:[%s1 + $0xc] sm:$0xf]
  %v121 = vld [vmem:[%s1 + $0x10] sm:$0xf]
  %v122 = vld [vmem:[%s1 + $0x14] sm:$0xf]
  %v123 = vld [vmem:[%s1 + $0x18] sm:$0xf]
  %v124 = vld [vmem:[%s1 + $0x1c] sm:$0xf]
  %v125 = vld [vmem:[%s1 + $0x20] sm:$0xf]
  %v126 = vld [vmem:[%s1 + $0x24] sm:$0xf]
  %v127 = vld [vmem:[%s1 + $0x28] sm:$0xf]
  %v128 = vld [vmem:[%s1 + $0x2c] sm:$0xf]
  %v129 = vld [vmem:[%s1 + $0x30] sm:$0xf]
  %v130 = vld [vmem:[%s1 + $0x34] sm:$0xf]
  %v131 = vld [vmem:[%s1 + $0x38] sm:$0xf]
  %v132 = vld [vmem:[%s1 + $0x3c] sm:$0xf]
  %v133 = vld [vmem:[%s1 + $0x40] sm:$0xf]
  %v134 = vld [vmem:[%s1 + $0x44] sm:$0xf]
  %v135 = vld [vmem:[%s1 + $0x48] sm:$0xf]
  %v136 = vld [vmem:[%s1 + $0x4c] sm:$0xf]
  %v137 = vld [vmem:[%s1 + $0x50] sm:$0xf]
  %v138 = vld [vmem:[%s1 + $0x54] sm:$0xf]
  %v139 = vld [vmem:[%s1 + $0x58] sm:$0xf]
  %v140 = vld [vmem:[%s1 + $0x5c] sm:$0xf]
  %v141 = vld [vmem:[%s1 + $0x60] sm:$0xf]
  %v142 = vld [vmem:[%s1 + $0x64] sm:$0xf]
  %v143 = vld [vmem:[%s1 + $0x68] sm:$0xf]
  %v171 = vunpack.c.l.b16 %v117
  %v172 = vunpack.c.l.b16 %v118
  %v173 = vunpack.c.l.b16 %v119
  %v174 = vunpack.c.l.b16 %v120
  %v175 = vunpack.c.l.b16 %v121
  %v176 = vunpack.c.l.b16 %v122
  %v177 = vunpack.c.l.b16 %v123
  %v178 = vunpack.c.l.b16 %v124
  %v179 = vunpack.c.l.b16 %v125
  %v180 = vunpack.c.l.b16 %v126
  %v181 = vunpack.c.l.b16 %v127
  %v182 = vunpack.c.l.b16 %v128
  %v183 = vunpack.c.l.b16 %v129
  %v184 = vunpack.c.l.b16 %v130
  %v185 = vunpack.c.l.b16 %v131
  %v186 = vunpack.c.l.b16 %v132
  %v187 = vunpack.c.l.b16 %v133
  %v188 = vunpack.c.l.b16 %v134
  %v189 = vunpack.c.l.b16 %v135
  %v190 = vunpack.c.l.b16 %v136
  %v191 = vunpack.c.l.b16 %v137
  %v192 = vunpack.c.l.b16 %v138
  %v193 = vunpack.c.l.b16 %v139
  %v194 = vunpack.c.l.b16 %v140
  %v195 = vunpack.c.l.b16 %v141
  %v196 = vunpack.c.l.b16 %v142
  %v197 = vunpack.c.l.b16 %v143
  %v198 = vpack.c.b16 %v172, %v171
  %v199 = vpack.c.b16 %v174, %v173
  %v200 = vpack.c.b16 %v176, %v175
  %v201 = vpack.c.b16 %v178, %v177
  %v202 = vpack.c.b16 %v180, %v179
  %v203 = vpack.c.b16 %v182, %v181
  %v204 = vpack.c.b16 %v184, %v183
  %v205 = vpack.c.b16 %v186, %v185
  %v206 = vpack.c.b16 %v188, %v187
  %v207 = vpack.c.b16 %v190, %v189
  %v208 = vpack.c.b16 %v192, %v191
  %v209 = vpack.c.b16 %v194, %v193
  %v210 = vpack.c.b16 %v196, %v195
  %v211 = vpack.c.b16 %v197, %v197
  %vm225 = vcmask 719872
  %v226 = vsel %vm225, %v71, 0
  %v228 = vsel %vm225, %v116, 0
  %vm230 = vcmask 1043456
  %v232 = vsel %vm230, %v211, 0
  %234 = vmatpush.bf16.msra.mxu0 %v205
  %235 = vmatpush.bf16.msra.mxu0 %v204
  %236 = vmatpush.bf16.msra.mxu0 %v203
  %237 = vmatpush.bf16.msra.mxu0 %v202
  %238 = vmatpush.bf16.msra.mxu0 %v201
  %239 = vmatpush.bf16.msra.mxu0 %v200
  %240 = vmatpush.bf16.msra.mxu0 %v199
  %241 = vmatpush.bf16.msra.mxu0 %v198
  %242 = vmatmul.bf16.gmra.mxu0 %v67
  %v243 = vpop.f32.mrf.mxu0
  %v244 = vadd.f32 0.0, %v243
  %v245 = vpop.f32.mrf.mxu0
  %v246 = vadd.f32 0.0, %v245
  %247 = vmatmul.bf16.gmra.mxu0 %v113
  %v248 = vpop.f32.mrf.mxu0
  %v249 = vadd.f32 0.0, %v248
  %v250 = vpop.f32.mrf.mxu0
  %v251 = vadd.f32 0.0, %v250
  %252 = vdwg.mxu0
  %253 = vmatpush.bf16.msra.mxu0 0
  %254 = vmatpush.bf16.msra.mxu0 0
  %255 = vmatpush.bf16.msra.mxu0 %v232
  %256 = vmatpush.bf16.msra.mxu0 %v210
  %257 = vmatpush.bf16.msra.mxu0 %v209
  %258 = vmatpush.bf16.msra.mxu0 %v208
  %259 = vmatpush.bf16.msra.mxu0 %v207
  %260 = vmatpush.bf16.msra.mxu0 %v206
  %261 = vmatmul.bf16.gmra.mxu0 %v226
  %v262 = vpop.f32.mrf.mxu0
  %v263 = vadd.f32 %v244, %v262
  %v264 = vpop.f32.mrf.mxu0
  %v265 = vadd.f32 %v246, %v264
  %266 = vmatmul.bf16.gmra.mxu0 %v228
  %v267 = vpop.f32.mrf.mxu0
  %v268 = vadd.f32 %v249, %v267
  %v269 = vpop.f32.mrf.mxu0
  %v270 = vadd.f32 %v251, %v269
  %271 = vdwg.mxu0
  %v272 = vadd.f32 %v263, %v265
  %v273 = vadd.f32 %v272, %v268
  %v274 = vadd.f32 %v273, %v270
  %v275 = vrot.slane %v274, 4
  %v276 = vadd.f32 %v274, %v275
  %v277 = vrot.slane %v276, 2
  %v278 = vadd.f32 %v276, %v277
  %v279 = vrot.slane %v278, 1
  %v280 = vadd.f32 %v278, %v279
  %v281 = vmul.f32 %v263, %v263
  %v282 = vmul.f32 %v265, %v265
  %v283 = vmul.f32 %v268, %v268
  %v284 = vmul.f32 %v270, %v270
  %v285 = vadd.f32 %v281, %v282
  %v286 = vadd.f32 %v285, %v283
  %v287 = vadd.f32 %v286, %v284
  %v288 = vrot.slane %v287, 4
  %v289 = vadd.f32 %v287, %v288
  %v290 = vrot.slane %v289, 2
  %v291 = vadd.f32 %v289, %v290
  %v292 = vrot.slane %v291, 1
  %v293 = vadd.f32 %v291, %v292
  %v294 = vld [vmem:[%s4] sm:$0xff]
  %v295 = vld [vmem:[%s4 + $0x8] sm:$0xff]
  %v296 = vld [vmem:[%s4 + $0x10] sm:$0xff]
  %v297 = vld [vmem:[%s4 + $0x18] sm:$0xff]
  %v298 = vld [vmem:[%s4 + $0x20] sm:$0xff]
  %v299 = vld [vmem:[%s4 + $0x28] sm:$0xff]
  %v300 = vld [vmem:[%s4 + $0x30] sm:$0xff]
  %v301 = vld [vmem:[%s4 + $0x38] sm:$0xff]
  %v302 = vld [vmem:[%s4 + $0x40] sm:$0xff]
  %v303 = vld [vmem:[%s4 + $0x48] sm:$0xff]
  %v304 = vld [vmem:[%s4 + $0x50] sm:$0xff]
  %v305 = vld [vmem:[%s4 + $0x58] sm:$0xff]
  %v306 = vld [vmem:[%s4 + $0x60] sm:$0xff]
  %v307 = vld [vmem:[%s4 + $0x68] sm:$0xff]
  %v308 = vld [vmem:[%s4 + $0x70] sm:$0xff]
  %v309 = vld [vmem:[%s4 + $0x78] sm:$0xff]
  %310 = vmatpush.msra.mxu0 %v309
  %311 = vmatpush.msra.mxu0 %v308
  %312 = vmatpush.msra.mxu0 %v307
  %313 = vmatpush.msra.mxu0 %v306
  %314 = vmatpush.msra.mxu0 %v305
  %315 = vmatpush.msra.mxu0 %v304
  %316 = vmatpush.msra.mxu0 %v303
  %317 = vmatpush.msra.mxu0 %v302
  %318 = vmatpush.msra.mxu0 %v301
  %319 = vmatpush.msra.mxu0 %v300
  %320 = vmatpush.msra.mxu0 %v299
  %321 = vmatpush.msra.mxu0 %v298
  %322 = vmatpush.msra.mxu0 %v297
  %323 = vmatpush.msra.mxu0 %v296
  %324 = vmatpush.msra.mxu0 %v295
  %325 = vmatpush.msra.mxu0 %v294
  %326 = vmatmul.f32.gmra.mxu0 %v280
  %v327 = vpop.f32.mrf.mxu0
  %v328 = vadd.f32 0.0, %v327
  %329 = vdwg.mxu0
  %330 = vmatpush.msra.mxu0 %v309
  %331 = vmatpush.msra.mxu0 %v308
  %332 = vmatpush.msra.mxu0 %v307
  %333 = vmatpush.msra.mxu0 %v306
  %334 = vmatpush.msra.mxu0 %v305
  %335 = vmatpush.msra.mxu0 %v304
  %336 = vmatpush.msra.mxu0 %v303
  %337 = vmatpush.msra.mxu0 %v302
  %338 = vmatpush.msra.mxu0 %v301
  %339 = vmatpush.msra.mxu0 %v300
  %340 = vmatpush.msra.mxu0 %v299
  %341 = vmatpush.msra.mxu0 %v298
  %342 = vmatpush.msra.mxu0 %v297
  %343 = vmatpush.msra.mxu0 %v296
  %344 = vmatpush.msra.mxu0 %v295
  %345 = vmatpush.msra.mxu0 %v294
  %346 = vmatmul.f32.gmra.mxu0 %v293
  %v347 = vpop.f32.mrf.mxu0
  %v348 = vadd.f32 0.0, %v347
  %349 = vdwg.mxu0
  %v350 = vrcp.pop 512.0
  %v351 = vmul.f32 512.0, %v350
  %v352 = vsub.f32 1.0, %v351
  %v353 = vmul.f32 %v350, %v352
  %v354 = vadd.f32 %v350, %v353
  %vm355 = vweird.f32 %v350
  %v356 = vsel %vm355, %v350, %v354
  %v357 = vmul.f32 %v328, %v356
  %v358 = vmul.f32 %v348, %v356
  %v359 = vmul.f32 %v357, %v357
  %v360 = vsub.f32 %v358, %v359
  %v361 = vmax.f32 %v360, 0.0
  %v362 = vld [vmem:[%s2] sm:$0x1]
  %v363 = vadd.f32 %v361, 1e-05
  %v364 = vrsqrt.pop %v363
  %v365 = vmul.f32 %v364, %v363
  %v366 = vmul.f32 %v365, %v364
  %v367 = vmul.f32 0.5, %v366
  %v368 = vsub.f32 1.5, %v367
  %v369 = vmul.f32 %v364, %v368
  %vm370 = vweird.f32 %v363
  %vm371 = vweird.f32 %v364
  %vm372 = vmor %vm370, %vm371
  %v373 = vsel %vm372, %v364, %v369
  %v374 = vmul.f32 %v362, %v373
  %v375 = vld [vmem:[%s3] sm:$0x1]
  %v376 = vmul.f32 %v357, %v374
  %v377 = vsub.f32 %v375, %v376
  %v378 = vld [vmem:[%s5] sm:$0xff]
  %vm379 = vcmask 64512
  %v381 = vsel %vm379, %v374, 0
  %383 = vmatpush.msra.mxu0 0.0
  %384 = vmatpush.msra.mxu0 0.0
  %385 = vmatpush.msra.mxu0 0.0
  %386 = vmatpush.msra.mxu0 0.0
  %387 = vmatpush.msra.mxu0 0.0
  %388 = vmatpush.msra.mxu0 0.0
  %389 = vmatpush.msra.mxu0 0.0
  %390 = vmatpush.msra.mxu0 0.0
  %391 = vmatpush.msra.mxu0 0.0
  %392 = vmatpush.msra.mxu0 0.0
  %393 = vmatpush.msra.mxu0 0.0
  %394 = vmatpush.msra.mxu0 0.0
  %395 = vmatpush.msra.mxu0 0.0
  %396 = vmatpush.msra.mxu0 0.0
  %397 = vmatpush.msra.mxu0 0.0
  %398 = vmatpush.msra.mxu0 %v378
  %399 = vmatmul.f32.gmra.mxu0 %v381
  %v400 = vpop.f32.mrf.mxu0
  %v401 = vadd.f32 0.0, %v400
  %402 = vdwg.mxu0
  %v404 = vsel %vm379, %v377, 0
  %406 = vmatpush.msra.mxu0 0.0
  %407 = vmatpush.msra.mxu0 0.0
  %408 = vmatpush.msra.mxu0 0.0
  %409 = vmatpush.msra.mxu0 0.0
  %410 = vmatpush.msra.mxu0 0.0
  %411 = vmatpush.msra.mxu0 0.0
  %412 = vmatpush.msra.mxu0 0.0
  %413 = vmatpush.msra.mxu0 0.0
  %414 = vmatpush.msra.mxu0 0.0
  %415 = vmatpush.msra.mxu0 0.0
  %416 = vmatpush.msra.mxu0 0.0
  %417 = vmatpush.msra.mxu0 0.0
  %418 = vmatpush.msra.mxu0 0.0
  %419 = vmatpush.msra.mxu0 0.0
  %420 = vmatpush.msra.mxu0 0.0
  %421 = vmatpush.msra.mxu0 %v378
  %422 = vmatmul.f32.gmra.mxu0 %v404
  %v423 = vpop.f32.mrf.mxu0
  %v424 = vadd.f32 0.0, %v423
  %425 = vdwg.mxu0
  %v426 = vperm.slane %v401, 0
  %v427 = vmul.f32 %v263, %v426
  %v428 = vmul.f32 %v265, %v426
  %v429 = vmul.f32 %v268, %v426
  %v430 = vmul.f32 %v270, %v426
  %v431 = vperm.slane %v424, 0
  %v432 = vadd.f32 %v427, %v431
  %v433 = vadd.f32 %v428, %v431
  %v434 = vadd.f32 %v429, %v431
  %v435 = vadd.f32 %v430, %v431
  %436 = vst [vmem:[%s6] sm:$0xff] %v432
  %437 = vst [vmem:[%s6 + $0x8] sm:$0xff] %v433
  %438 = vst [vmem:[%s6 + $0x10] sm:$0xff] %v434
  %439 = vst [vmem:[%s6 + $0x18] sm:$0xff] %v435
  // Predicated region
  $region26: #{relu_conv_bn.1} parent=0 // pred_check
    _
  $region27: #{relu_conv_bn.1} parent=0 // pred_check_branch
    %441 = sbr.rel (0) target = $region29
  $region28: #{relu_conv_bn.1} parent=0 // pred_region
    _
  $region29: #{relu_conv_bn.1} parent=0 // pred_fallthru
    _
  // Predicated region
  $region30: #{relu_conv_bn.1} parent=0 // pred_check
    _
  $region31: #{relu_conv_bn.1} parent=0 // pred_check_branch
    %443 = sbr.rel (0) target = $region33
  $region32: #{relu_conv_bn.1} parent=0 // pred_region
    _
  $region33: #{relu_conv_bn.1} parent=0 // pred_fallthru
    _

</llo_original>
